<compile_context>
chip_gen: v5e
topology: v5e:2x2
jax: 0.10.0
libtpu: 0.0.40
codegen_flags: <defaults>
</compile_context>

<pallas_src>
import functools

import jax
import jax.numpy as jnp
from jax.experimental import pallas as pl
from jax.experimental.pallas import tpu as pltpu

H1 = 150  # lin1 output width
H2 = 50   # lin2 output width

MAX_TM = 2048
# Keep the VMEM-resident fused layer-1 weight well inside v7x's 64 MiB physical
# VMEM (bf16 bytes). Beyond this, an HBM-gather path would be required.
W1_RESIDENT_BYTES_LIMIT = 8 * 1024 * 1024


def _round_up(x, m):
    return -(-x // m) * m


# ---------------------------------------------------------------------------
# Pallas kernel: fused (one-hot embed + lin1+bn1 + relu) -> (lin2+bn2 + relu)
# ---------------------------------------------------------------------------
def _dsb_kernel(nc_ref, cat_ref, w1_ref, b1_ref, w2_ref, b2_ref, o_ref, *, cards):
    tm = nc_ref.shape[0]
    ids = cat_ref[...]                                    # (TM, n_cat) int32

    # Build [non_cat | onehot_0 | onehot_1 | ...] in bf16.  Each one-hot slice
    # is only card_j lanes wide (one compare per column, no full-width adds);
    # the embedding tables + bn1 were folded into w1 at build time, so the
    # one-hot @ w1 reproduces the embedding gather exactly.
    parts = [nc_ref[...].astype(jnp.bfloat16)]
    for j, card in enumerate(cards):
        iota = jax.lax.broadcasted_iota(jnp.int32, (tm, card), 1)
        parts.append((iota == ids[:, j:j + 1]).astype(jnp.bfloat16))
    x = jnp.concatenate(parts, axis=1)                    # (TM, n_nc + sum_cards)

    # layer 1: relu( x @ W1 + b1 )   -- single MXU pass, bn1 folded, f32 accum.
    h1 = jnp.dot(x, w1_ref[...], preferred_element_type=jnp.float32) + b1_ref[...]
    h1 = jnp.maximum(h1, 0.0)

    # layer 2: relu( h1 @ W2 + b2 )  -- bf16 MXU operands, bn2 folded, f32 accum.
    h2 = (jnp.dot(h1.astype(jnp.bfloat16), w2_ref[...],
                  preferred_element_type=jnp.float32) + b2_ref[...])
    o_ref[...] = jnp.maximum(h2, 0.0)


def dsb_base_forward(fused, non_cat, cat):
    """non_cat: (B, n_non_cat) f32, cat: (B, n_cat) int -> (B, 50) f32."""
    cards = fused["cards"]
    sum_cards = int(sum(cards))
    B, n_nc = non_cat.shape
    n_cat = cat.shape[1]
    d1 = n_nc + sum_cards

    if d1 * H1 * 2 > W1_RESIDENT_BYTES_LIMIT:
        # TODO(synk): fall back to HBM-resident embedding tables + DMA row
        #             gather (memory_space=pl.ANY) for very high cardinalities.
        raise NotImplementedError(
            "total categorical cardinality too large for the VMEM-resident "
            "fused-weight path")

    # Batch tile: up to 2048 rows; for smaller batches pick ~B/2 (rounded to a
    # multiple of 8) so the grid has >= 2 tiles and v7x can shard them across
    # its 2 TensorCores.  Ragged batch handled by zero-padding (kernel is
    # branch-free); result sliced back to B.
    TM = min(MAX_TM, max(8, _round_up(-(-B // 2), 8)))
    B_pad = _round_up(B, TM)
    if B_pad != B:
        non_cat = jnp.pad(non_cat, ((0, B_pad - B), (0, 0)))
        cat = jnp.pad(cat, ((0, B_pad - B), (0, 0)))  # index 0 is always safe

    kernel = functools.partial(_dsb_kernel, cards=cards)

    def batch_spec(cols):
        return pl.BlockSpec((TM, cols), lambda i: (i, 0))

    def resident_spec(rows, cols):
        return pl.BlockSpec((rows, cols), lambda i: (0, 0))

    # VMEM budget @ TM=2048: lane-padded batch blocks (nc, ids, out) are
    # ~1 MiB each x 2 buffers = 6 MiB; intermediates (x, h1, h2) ~4 MiB;
    # resident bf16 weights are a few KiB -> well under 32 MiB on every
    # generation (v7x 64 MiB physical, v5e scoped default is only 16 MiB so
    # the explicit limit is required there).
    out = pl.pallas_call(
        kernel,
        out_shape=jax.ShapeDtypeStruct((B_pad, H2), jnp.float32),
        grid=(B_pad // TM,),
        in_specs=[
            batch_spec(n_nc),                    # non_cat tile (f32)
            batch_spec(n_cat),                   # categorical ids tile (int32)
            resident_spec(d1, H1),               # fused [Wnc; emb@W1] (bf16, bn1 folded)
            resident_spec(1, H1),                # b1 (f32, bn1 folded)
            resident_spec(H1, H2),               # W2 (bf16, bn2 folded)
            resident_spec(1, H2),                # b2 (f32, bn2 folded)
        ],
        out_specs=batch_spec(H2),
        compiler_params=pltpu.CompilerParams(
            dimension_semantics=("parallel",),   # shard batch tiles on v7x 2-TC
            vmem_limit_bytes=32 * 1024 * 1024,
        ),
    )(non_cat.astype(jnp.float32), cat.astype(jnp.int32),
      fused["w1"], fused["b1"], fused["w2"], fused["b2"])
    return out[:B]


# ---------------------------------------------------------------------------
# Parameter construction (deterministic, synthetic) + BN / embedding folding
# ---------------------------------------------------------------------------
def init_params(key, cat_dims, n_non_categorical):
    n_emb_out = sum(d for _, d in cat_dims)
    d_in = n_non_categorical + n_emb_out
    eps = 1e-5

    keys = jax.random.split(key, 32)
    ki = iter(range(32))

    def nk():
        return keys[next(ki)]

    params = {}
    # Embedding tables (PyTorch nn.Embedding: N(0,1) init).
    params["emb_tables"] = [
        jax.random.normal(nk(), (card, dim), dtype=jnp.float32)
        for card, dim in cat_dims
    ]

    def linear(d_i, d_o):
        # Stored as (in, out): x @ W + b  ==  PyTorch x @ W_t.T + b.
        w = jax.random.normal(nk(), (d_i, d_o), dtype=jnp.float32) * (1.0 / jnp.sqrt(d_i))
        b = jax.random.normal(nk(), (1, d_o), dtype=jnp.float32) * 0.1
        return w, b

    def bn_affine(d):
        # Eval-mode BatchNorm1d folded to per-feature scale/shift.
        gamma = 1.0 + 0.1 * jax.random.normal(nk(), (1, d), dtype=jnp.float32)
        beta = 0.1 * jax.random.normal(nk(), (1, d), dtype=jnp.float32)
        running_mean = 0.05 * jax.random.normal(nk(), (1, d), dtype=jnp.float32)
        running_var = 1.0 + 0.1 * jnp.abs(jax.random.normal(nk(), (1, d), dtype=jnp.float32))
        scale = gamma / jnp.sqrt(running_var + eps)
        shift = beta - running_mean * scale
        return scale, shift

    params["w1"], params["b1"] = linear(d_in, H1)
    params["bn1_scale"], params["bn1_shift"] = bn_affine(H1)
    params["w2"], params["b2"] = linear(H1, H2)
    params["bn2_scale"], params["bn2_shift"] = bn_affine(H2)
    return params


def build_fused_params(params, cat_dims, n_non_categorical):
    """Fold BN into the linears and the embedding tables into a single W1.

    Resulting layer-1 weight has layout [non_cat rows ; one-hot rows per table],
    matching the kernel's in-kernel [non_cat | one-hot] lane concat.
    """
    cards = tuple(int(c) for c, _ in cat_dims)
    dims = tuple(int(d) for _, d in cat_dims)

    s1, t1 = params["bn1_scale"], params["bn1_shift"]
    s2, t2 = params["bn2_scale"], params["bn2_shift"]
    w1, b1 = params["w1"], params["b1"]
    w2, b2 = params["w2"], params["b2"]

    n_nc = n_non_categorical
    blocks = [w1[:n_nc]]                                   # (n_nc, 150)
    col = n_nc
    for tbl, d in zip(params["emb_tables"], dims):
        blocks.append(tbl @ w1[col:col + d])               # (card_j, 150)
        col += d
    w1_fused = jnp.concatenate(blocks, axis=0) * s1        # (n_nc + sum_cards, 150)

    return {
        "cards": cards,
        "w1": w1_fused.astype(jnp.bfloat16),
        "b1": (b1 * s1 + t1).astype(jnp.float32),
        "w2": (w2 * s2).astype(jnp.bfloat16),
        "b2": (b2 * s2 + t2).astype(jnp.float32),
    }


# ---------------------------------------------------------------------------
# Pure-JAX f32 reference (unfused math) for a sanity check.
# ---------------------------------------------------------------------------
def dsb_base_ref(params, non_cat, cat):
    embs = [jnp.take(tbl, cat[:, j], axis=0) for j, tbl in enumerate(params["emb_tables"])]
    x = jnp.concatenate([non_cat.astype(jnp.float32)] + embs, axis=1)
    h1 = x @ params["w1"] + params["b1"]
    h1 = jnp.maximum(h1 * params["bn1_scale"] + params["bn1_shift"], 0.0)
    h2 = h1 @ params["w2"] + params["b2"]
    h2 = jnp.maximum(h2 * params["bn2_scale"] + params["bn2_shift"], 0.0)
    return h2


if __name__ == "__main__":
    # Small synthetic config consistent with DSBBase(__init__):
    cat_dims = [(5, 3), (7, 4), (4, 2)]   # total embedding width = 9
    n_non_categorical = 6                 # D_in = 6 + 9 = 15
    batch = 24                            # exercises padding + a 2-tile grid

    key = jax.random.PRNGKey(0)
    k_par, k_nc, k_cat = jax.random.split(key, 3)

    params = init_params(k_par, cat_dims, n_non_categorical)
    fused = build_fused_params(params, cat_dims, n_non_categorical)

    non_cat = jax.random.normal(k_nc, (batch, n_non_categorical), dtype=jnp.float32)
    cat_cols = []
    ck = k_cat
    for card, _ in cat_dims:
        ck, sk = jax.random.split(ck)
        cat_cols.append(jax.random.randint(sk, (batch, 1), 0, card, dtype=jnp.int32))
    cat = jnp.concatenate(cat_cols, axis=1)

    out = jax.block_until_ready(dsb_base_forward(fused, non_cat, cat))
    ref = jax.block_until_ready(dsb_base_ref(params, non_cat, cat))

    assert out.shape == (batch, H2), out.shape
    # bf16 MXU operands vs. the pure-f32 reference: allow ~3% of output scale.
    err = float(jnp.max(jnp.abs(out - ref)))
    tol = 3e-2 * float(jnp.max(jnp.abs(ref))) + 3e-2
    assert err <= tol, (err, tol)

    print("KERNEL_OK")
</pallas_src>

<mosaic_0001>
module attributes {stable_mosaic.version = 11 : i64} {
  func.func @_dsb_kernel(%arg0: i32, %arg1: memref<16x6xf32, #tpu.memory_space<vmem>>, %arg2: memref<16x3xi32, #tpu.memory_space<vmem>>, %arg3: memref<22x150xbf16, #tpu.memory_space<vmem>>, %arg4: memref<1x150xf32, #tpu.memory_space<vmem>>, %arg5: memref<150x50xbf16, #tpu.memory_space<vmem>>, %arg6: memref<1x50xf32, #tpu.memory_space<vmem>>, %arg7: memref<16x50xf32, #tpu.memory_space<vmem>>) attributes {dimension_semantics = [#tpu.dimension_semantics<parallel>], iteration_bounds = array<i64: 2>, scalar_prefetch = 0 : i64, scratch_operands = 0 : i64, tpu.core_type = #tpu.core_type<tc>, window_params = [{transform_indices = @transform_0, window_bounds = array<i64: 16, 6>}, {transform_indices = @transform_1, window_bounds = array<i64: 16, 3>}, {pipeline_mode = #tpu.pipeline_mode<synchronous>, transform_indices = @transform_2, window_bounds = array<i64: 22, 150>}, {pipeline_mode = #tpu.pipeline_mode<synchronous>, transform_indices = @transform_3, window_bounds = array<i64: 1, 150>}, {pipeline_mode = #tpu.pipeline_mode<synchronous>, transform_indices = @transform_4, window_bounds = array<i64: 150, 50>}, {pipeline_mode = #tpu.pipeline_mode<synchronous>, transform_indices = @transform_5, window_bounds = array<i64: 1, 50>}, {transform_indices = @transform_6, window_bounds = array<i64: 16, 50>}]} {
    %c0 = arith.constant 0 : index
    %c0_0 = arith.constant 0 : index
    %0 = vector.load %arg2[%c0, %c0_0] : memref<16x3xi32, #tpu.memory_space<vmem>>, vector<16x3xi32>
    %c0_1 = arith.constant 0 : index
    %c0_2 = arith.constant 0 : index
    %1 = vector.load %arg1[%c0_1, %c0_2] : memref<16x6xf32, #tpu.memory_space<vmem>>, vector<16x6xf32>
    %2 = arith.truncf %1 : vector<16x6xf32> to vector<16x6xbf16>
    %3 = tpu.iota {dimensions = array<i32: 1>} : vector<16x5xi32>
    %4 = vector.extract_strided_slice %0 {offsets = [0, 0], sizes = [16, 1], strides = [1, 1]} : vector<16x3xi32> to vector<16x1xi32>
    %5 = vector.broadcast %4 : vector<16x1xi32> to vector<16x5xi32>
    %6 = arith.cmpi eq, %3, %5 : vector<16x5xi32>
    %7 = arith.extui %6 : vector<16x5xi1> to vector<16x5xi32>
    %8 = arith.sitofp %7 : vector<16x5xi32> to vector<16x5xf32>
    %9 = arith.truncf %8 : vector<16x5xf32> to vector<16x5xbf16>
    %10 = tpu.iota {dimensions = array<i32: 1>} : vector<16x7xi32>
    %11 = vector.extract_strided_slice %0 {offsets = [0, 1], sizes = [16, 1], strides = [1, 1]} : vector<16x3xi32> to vector<16x1xi32>
    %12 = vector.broadcast %11 : vector<16x1xi32> to vector<16x7xi32>
    %13 = arith.cmpi eq, %10, %12 : vector<16x7xi32>
    %14 = arith.extui %13 : vector<16x7xi1> to vector<16x7xi32>
    %15 = arith.sitofp %14 : vector<16x7xi32> to vector<16x7xf32>
    %16 = arith.truncf %15 : vector<16x7xf32> to vector<16x7xbf16>
    %17 = tpu.iota {dimensions = array<i32: 1>} : vector<16x4xi32>
    %18 = vector.extract_strided_slice %0 {offsets = [0, 2], sizes = [16, 1], strides = [1, 1]} : vector<16x3xi32> to vector<16x1xi32>
    %19 = vector.broadcast %18 : vector<16x1xi32> to vector<16x4xi32>
    %20 = arith.cmpi eq, %17, %19 : vector<16x4xi32>
    %21 = arith.extui %20 : vector<16x4xi1> to vector<16x4xi32>
    %22 = arith.sitofp %21 : vector<16x4xi32> to vector<16x4xf32>
    %23 = arith.truncf %22 : vector<16x4xf32> to vector<16x4xbf16>
    %24 = tpu.concatenate %2, %9, %16, %23 in 1 : vector<16x6xbf16>, vector<16x5xbf16>, vector<16x7xbf16>, vector<16x4xbf16> -> vector<16x22xbf16>
    %c0_3 = arith.constant 0 : index
    %c0_4 = arith.constant 0 : index
    %25 = vector.load %arg3[%c0_3, %c0_4] : memref<22x150xbf16, #tpu.memory_space<vmem>>, vector<22x150xbf16>
    %cst = arith.constant dense<0.000000e+00> : vector<16x150xf32>
    %26 = tpu.matmul %24, %25, %cst {dimension_numbers = #tpu.dot_dimension_numbers<[1], [0], [0], [1], [0, 0, 1, 1], [], []>} : vector<16x22xbf16>, vector<22x150xbf16>, vector<16x150xf32> -> vector<16x150xf32>
    %c0_5 = arith.constant 0 : index
    %c0_6 = arith.constant 0 : index
    %27 = vector.load %arg4[%c0_5, %c0_6] : memref<1x150xf32, #tpu.memory_space<vmem>>, vector<1x150xf32>
    %28 = vector.broadcast %27 : vector<1x150xf32> to vector<16x150xf32>
    %29 = arith.addf %26, %28 : vector<16x150xf32>
    %cst_7 = arith.constant 0.000000e+00 : f32
    %30 = vector.broadcast %cst_7 : f32 to vector<16x150xf32>
    %31 = arith.maximumf %29, %30 : vector<16x150xf32>
    %32 = arith.truncf %31 : vector<16x150xf32> to vector<16x150xbf16>
    %c0_8 = arith.constant 0 : index
    %c0_9 = arith.constant 0 : index
    %33 = vector.load %arg5[%c0_8, %c0_9] : memref<150x50xbf16, #tpu.memory_space<vmem>>, vector<150x50xbf16>
    %cst_10 = arith.constant dense<0.000000e+00> : vector<16x50xf32>
    %34 = tpu.matmul %32, %33, %cst_10 {dimension_numbers = #tpu.dot_dimension_numbers<[1], [0], [0], [1], [0, 0, 1, 1], [], []>} : vector<16x150xbf16>, vector<150x50xbf16>, vector<16x50xf32> -> vector<16x50xf32>
    %c0_11 = arith.constant 0 : index
    %c0_12 = arith.constant 0 : index
    %35 = vector.load %arg6[%c0_11, %c0_12] : memref<1x50xf32, #tpu.memory_space<vmem>>, vector<1x50xf32>
    %36 = vector.broadcast %35 : vector<1x50xf32> to vector<16x50xf32>
    %37 = arith.addf %34, %36 : vector<16x50xf32>
    %cst_13 = arith.constant 0.000000e+00 : f32
    %38 = vector.broadcast %cst_13 : f32 to vector<16x50xf32>
    %39 = arith.maximumf %37, %38 : vector<16x50xf32>
    %c0_14 = arith.constant 0 : index
    %c0_15 = arith.constant 0 : index
    %40 = vector.load %arg7[%c0_14, %c0_15] : memref<16x50xf32, #tpu.memory_space<vmem>>, vector<16x50xf32>
    tpu.vector_store %arg7[%c0_14, %c0_15], %39 {strides = array<i32>} : memref<16x50xf32, #tpu.memory_space<vmem>>, vector<16x50xf32>,
    return
  }
  func.func @transform_0(%arg0: i32) -> (i32, i32) {
    %c0_i32 = arith.constant 0 : i32
    %c0_i32_0 = arith.constant 0 : i32
    return %arg0, %c0_i32 : i32, i32
  }
  func.func @transform_1(%arg0: i32) -> (i32, i32) {
    %c0_i32 = arith.constant 0 : i32
    %c0_i32_0 = arith.constant 0 : i32
    return %arg0, %c0_i32 : i32, i32
  }
  func.func @transform_2(%arg0: i32) -> (i32, i32) {
    %c0_i32 = arith.constant 0 : i32
    %c0_i32_0 = arith.constant 0 : i32
    %c0_i32_1 = arith.constant 0 : i32
    return %c0_i32, %c0_i32_0 : i32, i32
  }
  func.func @transform_3(%arg0: i32) -> (i32, i32) {
    %c0_i32 = arith.constant 0 : i32
    %c0_i32_0 = arith.constant 0 : i32
    %c0_i32_1 = arith.constant 0 : i32
    return %c0_i32, %c0_i32_0 : i32, i32
  }
  func.func @transform_4(%arg0: i32) -> (i32, i32) {
    %c0_i32 = arith.constant 0 : i32
    %c0_i32_0 = arith.constant 0 : i32
    %c0_i32_1 = arith.constant 0 : i32
    return %c0_i32, %c0_i32_0 : i32, i32
  }
  func.func @transform_5(%arg0: i32) -> (i32, i32) {
    %c0_i32 = arith.constant 0 : i32
    %c0_i32_0 = arith.constant 0 : i32
    %c0_i32_1 = arith.constant 0 : i32
    return %c0_i32, %c0_i32_0 : i32, i32
  }
  func.func @transform_6(%arg0: i32) -> (i32, i32) {
    %c0_i32 = arith.constant 0 : i32
    %c0_i32_0 = arith.constant 0 : i32
    return %arg0, %c0_i32 : i32, i32
  }
}

</mosaic_0001>

<llo_original>
// kernel: tpu_custom_call.1
$region0: #{tpu_custom_call.1}
  #allocation0 [shape = 'u32[]', space=smem, size = 0x4, offset = 0x4, fixed_abs, tag = 'smem constant byte address 0x4 - core index']
  #allocation1 [shape = 'u32[72,128]{1,0:T(1,128)}', space=vmem, size = 0x9000, scoped, tag = 'internal scratch']
  %s0 = inlined_call_operand.vmem [shape: f32[32,6], index: 0, kind: input, shape index: {}]
  %s1 = inlined_call_operand.vmem [shape: s32[32,3], index: 1, kind: input, shape index: {}]
  %s2 = inlined_call_operand.vmem [shape: bf16[22,150], index: 2, kind: input, shape index: {}]
  %s3 = inlined_call_operand.vmem [shape: f32[1,150], index: 3, kind: input, shape index: {}]
  %s4 = inlined_call_operand.vmem [shape: bf16[150,50], index: 4, kind: input, shape index: {}]
  %s5 = inlined_call_operand.vmem [shape: f32[1,50], index: 5, kind: input, shape index: {}]
  %s6 = inlined_call_operand.hbm [shape: f32[32,50], index: 6, kind: output, shape index: {}]
  %s7 = sld [smem:[#allocation0]]
  $region57: #{tpu_custom_call.1} parent=0
    _
  %s9 = ssub.s32 1, %s7
  %s10 = scalar_select 0, %s9, %s7
  $region1: #{tpu_custom_call.1} parent=0
    #allocation2 [shape = 'u8[16384]{0}', space=vmem, size = 0x4000, scoped, tag = 'output window, operand 0']
    #allocation3 [shape = 's32[2]{0}', space=sflag, size = 0x8, scoped, tag = 'scoped memory for tpu_custom_call.1']
    %11 = vsyncpa [#allocation3], 0
    %s12 = scalar_lea.sflag [#allocation3], 1
    %13 = vsyncpa %s12, 0
    loop: start=0, step=1, limit=4
    $region2: #{tpu_custom_call.1} parent=1 // loop_pre_header
      _
    $region3: #{tpu_custom_call.1} parent=1 // loop_header
      %s15 = sphi 0, %s19
      %p16 = scmp.ge.s32.totalorder %s15, 4
      %s25 = sphi 0, %s27
      %s28 = sphi 0, %s25
      %s29 = sphi 0, %s28
      %s45 = sphi 0, %s29
      %s51 = sphi 0, %s53
      %s54 = sphi 0, %s51
      %s55 = sphi 0, %s54
      %s71 = sphi 0, %s55
      %s75 = sphi 0, %s75
      %s77 = sphi 0, %s75
      %s78 = sphi 0, %s77
      %s92 = sphi 0, %s78
      %s96 = sphi 0, %s96
      %s98 = sphi 0, %s96
      %s99 = sphi 0, %s98
      %s113 = sphi 0, %s99
      %s117 = sphi 0, %s117
      %s119 = sphi 0, %s117
      %s120 = sphi 0, %s119
      %s134 = sphi 0, %s120
      %s138 = sphi 0, %s138
      %s140 = sphi 0, %s138
      %s141 = sphi 0, %s140
      %s155 = sphi 0, %s141
      %s161 = sphi 0, %s163
      %s164 = sphi 0, %s161
      %s165 = sphi 0, %s164
      %s181 = sphi 0, %s165
    $region4: #{tpu_custom_call.1} parent=1 // loop_header_branch
      %18 = sbr.rel (%p16) target = $region8
    $region5: #{tpu_custom_call.1} parent=1 // loop_body
      %s20 = ssub.s32 %s15, 1
      %s21 = ssub.s32 %s15, 2
      %s22 = sadd.s32 %s15, 1
      %s23 = ssub.s32 %s15, %s22
      %p24 = scmp.eq.s32.totalorder %s23, 0
      %s26 = sadd.s32 %s25, 1
      %s27 = scalar_select %p24, %s25, %s26
      %p30 = pneg %p24
      %p31 = scmp.eq.s32.totalorder %s15, 1
      %p32 = por %p30, %p31
      %p33 = scmp.ne.s32.totalorder %s25, %s28
      %p34 = scmp.eq.s32.totalorder %s15, 0
      %p35 = por %p33, %p34
      %p36 = scmp.ne.s32.totalorder %s25, %s28
      %p37 = scmp.eq.s32.totalorder %s20, 1
      %p38 = por %p36, %p37
      %p39 = scmp.ne.s32.totalorder %s28, %s29
      %p40 = scmp.eq.s32.totalorder %s20, 0
      %p41 = por %p39, %p40
      %p42 = scmp.ne.s32.totalorder %s28, %s29
      %p43 = scmp.eq.s32.totalorder %s21, 1
      %p44 = por %p42, %p43
      %p46 = scmp.ne.s32.totalorder %s29, %s45
      %p47 = scmp.eq.s32.totalorder %s21, 0
      %p48 = por %p46, %p47
      %s49 = ssub.s32 %s15, %s22
      %p50 = scmp.eq.s32.totalorder %s49, 0
      %s52 = sadd.s32 %s51, 1
      %s53 = scalar_select %p50, %s51, %s52
      %p56 = pneg %p50
      %p57 = scmp.eq.s32.totalorder %s15, 1
      %p58 = por %p56, %p57
      %p59 = scmp.ne.s32.totalorder %s51, %s54
      %p60 = scmp.eq.s32.totalorder %s15, 0
      %p61 = por %p59, %p60
      %p62 = scmp.ne.s32.totalorder %s51, %s54
      %p63 = scmp.eq.s32.totalorder %s20, 1
      %p64 = por %p62, %p63
      %p65 = scmp.ne.s32.totalorder %s54, %s55
      %p66 = scmp.eq.s32.totalorder %s20, 0
      %p67 = por %p65, %p66
      %p68 = scmp.ne.s32.totalorder %s54, %s55
      %p69 = scmp.eq.s32.totalorder %s21, 1
      %p70 = por %p68, %p69
      %p72 = scmp.ne.s32.totalorder %s55, %s71
      %p73 = scmp.eq.s32.totalorder %s21, 0
      %p74 = por %p72, %p73
      %s76 = sadd.s32 %s75, 1
      %p79 = scmp.eq.s32.totalorder %s15, 1
      %p80 = scmp.ne.s32.totalorder %s75, %s77
      %p81 = scmp.eq.s32.totalorder %s15, 0
      %p82 = por %p80, %p81
      %p83 = scmp.ne.s32.totalorder %s75, %s77
      %p84 = scmp.eq.s32.totalorder %s20, 1
      %p85 = por %p83, %p84
      %p86 = scmp.ne.s32.totalorder %s77, %s78
      %p87 = scmp.eq.s32.totalorder %s20, 0
      %p88 = por %p86, %p87
      %p89 = scmp.ne.s32.totalorder %s77, %s78
      %p90 = scmp.eq.s32.totalorder %s21, 1
      %p91 = por %p89, %p90
      %p93 = scmp.ne.s32.totalorder %s78, %s92
      %p94 = scmp.eq.s32.totalorder %s21, 0
      %p95 = por %p93, %p94
      %s97 = sadd.s32 %s96, 1
      %p100 = scmp.eq.s32.totalorder %s15, 1
      %p101 = scmp.ne.s32.totalorder %s96, %s98
      %p102 = scmp.eq.s32.totalorder %s15, 0
      %p103 = por %p101, %p102
      %p104 = scmp.ne.s32.totalorder %s96, %s98
      %p105 = scmp.eq.s32.totalorder %s20, 1
      %p106 = por %p104, %p105
      %p107 = scmp.ne.s32.totalorder %s98, %s99
      %p108 = scmp.eq.s32.totalorder %s20, 0
      %p109 = por %p107, %p108
      %p110 = scmp.ne.s32.totalorder %s98, %s99
      %p111 = scmp.eq.s32.totalorder %s21, 1
      %p112 = por %p110, %p111
      %p114 = scmp.ne.s32.totalorder %s99, %s113
      %p115 = scmp.eq.s32.totalorder %s21, 0
      %p116 = por %p114, %p115
      %s118 = sadd.s32 %s117, 1
      %p121 = scmp.eq.s32.totalorder %s15, 1
      %p122 = scmp.ne.s32.totalorder %s117, %s119
      %p123 = scmp.eq.s32.totalorder %s15, 0
      %p124 = por %p122, %p123
      %p125 = scmp.ne.s32.totalorder %s117, %s119
      %p126 = scmp.eq.s32.totalorder %s20, 1
      %p127 = por %p125, %p126
      %p128 = scmp.ne.s32.totalorder %s119, %s120
      %p129 = scmp.eq.s32.totalorder %s20, 0
      %p130 = por %p128, %p129
      %p131 = scmp.ne.s32.totalorder %s119, %s120
      %p132 = scmp.eq.s32.totalorder %s21, 1
      %p133 = por %p131, %p132
      %p135 = scmp.ne.s32.totalorder %s120, %s134
      %p136 = scmp.eq.s32.totalorder %s21, 0
      %p137 = por %p135, %p136
      %s139 = sadd.s32 %s138, 1
      %p142 = scmp.eq.s32.totalorder %s15, 1
      %p143 = scmp.ne.s32.totalorder %s138, %s140
      %p144 = scmp.eq.s32.totalorder %s15, 0
      %p145 = por %p143, %p144
      %p146 = scmp.ne.s32.totalorder %s138, %s140
      %p147 = scmp.eq.s32.totalorder %s20, 1
      %p148 = por %p146, %p147
      %p149 = scmp.ne.s32.totalorder %s140, %s141
      %p150 = scmp.eq.s32.totalorder %s20, 0
      %p151 = por %p149, %p150
      %p152 = scmp.ne.s32.totalorder %s140, %s141
      %p153 = scmp.eq.s32.totalorder %s21, 1
      %p154 = por %p152, %p153
      %p156 = scmp.ne.s32.totalorder %s141, %s155
      %p157 = scmp.eq.s32.totalorder %s21, 0
      %p158 = por %p156, %p157
      %s159 = ssub.s32 %s15, %s22
      %p160 = scmp.eq.s32.totalorder %s159, 0
      %s162 = sadd.s32 %s161, 1
      %s163 = scalar_select %p160, %s161, %s162
      %p166 = pneg %p160
      %p167 = scmp.eq.s32.totalorder %s15, 1
      %p168 = por %p166, %p167
      %p169 = scmp.ne.s32.totalorder %s161, %s164
      %p170 = scmp.eq.s32.totalorder %s15, 0
      %p171 = por %p169, %p170
      %p172 = scmp.ne.s32.totalorder %s161, %s164
      %p173 = scmp.eq.s32.totalorder %s20, 1
      %p174 = por %p172, %p173
      %p175 = scmp.ne.s32.totalorder %s164, %s165
      %p176 = scmp.eq.s32.totalorder %s20, 0
      %p177 = por %p175, %p176
      %p178 = scmp.ne.s32.totalorder %s164, %s165
      %p179 = scmp.eq.s32.totalorder %s21, 1
      %p180 = por %p178, %p179
      %p182 = scmp.ne.s32.totalorder %s165, %s181
      %p183 = scmp.eq.s32.totalorder %s21, 0
      %p184 = por %p182, %p183
      %p185 = scmp.le.s32.totalorder 1, %s15
      %p186 = scmp.lt.s32.totalorder %s15, 3
      %p187 = pnand %p185, %p186
      %p188 = pneg %p187
      // Predicated region
      $region9: #{tpu_custom_call.1} parent=5 // pred_check
        _
      $region10: #{tpu_custom_call.1} parent=5 // pred_check_branch
        %190 = sbr.rel (%p187) target = $region12
      $region11: #{tpu_custom_call.1} parent=5 // pred_region
        %s191 = ssub.s32 %s15, 1
        // Predicated region
        $region13: #{tpu_custom_call.1} parent=11 // pred_check
          %p192 = pneg %p88
        $region14: #{tpu_custom_call.1} parent=11 // pred_check_branch
          %194 = sbr.rel (%p192) target = $region16
        $region15: #{tpu_custom_call.1} parent=11 // pred_region
          _
        $region16: #{tpu_custom_call.1} parent=11 // pred_fallthru
          _
        // Predicated region
        $region17: #{tpu_custom_call.1} parent=11 // pred_check
          %p195 = pneg %p109
        $region18: #{tpu_custom_call.1} parent=11 // pred_check_branch
          %197 = sbr.rel (%p195) target = $region20
        $region19: #{tpu_custom_call.1} parent=11 // pred_region
          _
        $region20: #{tpu_custom_call.1} parent=11 // pred_fallthru
          _
        // Predicated region
        $region21: #{tpu_custom_call.1} parent=11 // pred_check
          %p198 = pneg %p130
        $region22: #{tpu_custom_call.1} parent=11 // pred_check_branch
          %200 = sbr.rel (%p198) target = $region24
        $region23: #{tpu_custom_call.1} parent=11 // pred_region
          _
        $region24: #{tpu_custom_call.1} parent=11 // pred_fallthru
          _
        // Predicated region
        $region25: #{tpu_custom_call.1} parent=11 // pred_check
          %p201 = pneg %p151
        $region26: #{tpu_custom_call.1} parent=11 // pred_check_branch
          %203 = sbr.rel (%p201) target = $region28
        $region27: #{tpu_custom_call.1} parent=11 // pred_region
          _
        $region28: #{tpu_custom_call.1} parent=11 // pred_fallthru
          _
      $region12: #{tpu_custom_call.1} parent=5 // pred_fallthru
        _
      %p204 = scmp.lt.s32.totalorder %s15, 2
      // Predicated region
      $region29: #{tpu_custom_call.1} parent=5 // pred_check
        %p205 = pneg %p204
      $region30: #{tpu_custom_call.1} parent=5 // pred_check_branch
        %207 = sbr.rel (%p205) target = $region32
      $region31: #{tpu_custom_call.1} parent=5 // pred_region
        // Predicated region
        $region33: #{tpu_custom_call.1} parent=31 // pred_check
          %p208 = pneg %p35
        $region34: #{tpu_custom_call.1} parent=31 // pred_check_branch
          %210 = sbr.rel (%p208) target = $region36
        $region35: #{tpu_custom_call.1} parent=31 // pred_region
          %s211 = smul.u32 2, %s15
          %p212 = scmp.lt.s32.totalorder %s211, 3
          %s213 = scalar_select %p212, %s211, 3
          %s214 = smul.addr %s213, 8
          %s215 = scalar_lea.vmem %s0, %s214
          %s216 = smul.u32 2, %s15
        $region36: #{tpu_custom_call.1} parent=31 // pred_fallthru
          _
        // Predicated region
        $region37: #{tpu_custom_call.1} parent=31 // pred_check
          %p217 = pneg %p61
        $region38: #{tpu_custom_call.1} parent=31 // pred_check_branch
          %219 = sbr.rel (%p217) target = $region40
        $region39: #{tpu_custom_call.1} parent=31 // pred_region
          %s220 = smul.u32 2, %s15
          %p221 = scmp.lt.s32.totalorder %s220, 3
          %s222 = scalar_select %p221, %s220, 3
          %s223 = smul.addr %s222, 8
          %s224 = scalar_lea.vmem %s1, %s223
          %s225 = smul.u32 2, %s15
        $region40: #{tpu_custom_call.1} parent=31 // pred_fallthru
          _
      $region32: #{tpu_custom_call.1} parent=5 // pred_fallthru
        _
      %p226 = scmp.le.s32.totalorder 1, %s15
      %p227 = scmp.lt.s32.totalorder %s15, 3
      %p228 = pnand %p226, %p227
      %p229 = pneg %p228
      // Predicated region
      $region41: #{tpu_custom_call.1} parent=5 // pred_check
        _
      $region42: #{tpu_custom_call.1} parent=5 // pred_check_branch
        %231 = sbr.rel (%p228) target = $region44
      $region43: #{tpu_custom_call.1} parent=5 // pred_region
        %s232 = ssub.s32 %s15, 1
        %s233 = smul.u32 2, %s20
        %p234 = scmp.lt.s32.totalorder %s233, 3
        %s235 = scalar_select %p234, %s233, 3
        %s236 = smul.addr %s235, 8
        %s237 = scalar_lea.vmem %s0, %s236
        %p238 = pneg %p41
        %p239 = pneg %p38
        %s240 = smul.u32 2, %s20
        %p241 = scmp.lt.s32.totalorder %s240, 3
        %s242 = scalar_select %p241, %s240, 3
        %s243 = smul.addr %s242, 8
        %s244 = scalar_lea.vmem %s1, %s243
        %p245 = pneg %p67
        %p246 = pneg %p64
        %p247 = pneg %p88
        %p248 = pneg %p85
        %p249 = pneg %p109
        %p250 = pneg %p106
        %p251 = pneg %p130
        %p252 = pneg %p127
        %p253 = pneg %p151
        %p254 = pneg %p148
        %p255 = pneg %p177
        %p256 = pneg %p174
        %s257 = sand.u32 %s164, 1
        %s258 = scalar_lea.sflag [#allocation3], %s257
        %s259 = sand.u32 %s164, 1
        %s260 = smul.addr %s259, 16
        %s261 = scalar_lea.vmem [#allocation2], %s260
        %s262 = smul.u32 2, %s20
        %p263 = scmp.lt.s32.totalorder %s262, 3
        %s264 = scalar_select %p263, %s262, 3
        %s265 = smul.addr %s264, 8
        %s266 = scalar_lea.vmem %s0, %s265
        %s267 = smul.u32 2, %s20
        %s268 = smul.u32 2, %s20
        %p269 = scmp.lt.s32.totalorder %s268, 3
        %s270 = scalar_select %p269, %s268, 3
        %s271 = smul.addr %s270, 8
        %s272 = scalar_lea.vmem %s1, %s271
        %s273 = smul.u32 2, %s20
        %s274 = smul.u32 2, %s20
        %v276 = vld [vmem:[%s272] sm:$0xff]
        %v277 = vld [vmem:[%s272 + $0x8] sm:$0xff]
        %v278 = vld [vmem:[%s266] sm:$0xff]
        %v279 = vld [vmem:[%s266 + $0x8] sm:$0xff]
        %v280 = vpack.c.bf16 %v278, %v278
        %v281 = vpack.c.bf16 %v279, %v279
        %v282 = vlaneseq
        %v283 = vand.u32 %v282, 127
        %284 = vset.pattern.permute.xlu0 0
        %285 = vperm.xlu0 %284, %v276
        %v286 = vpop.permute.xlu0 %285
        %287 = vset.pattern.permute.xlu0 0
        %288 = vperm.xlu0 %287, %v277
        %v289 = vpop.permute.xlu0 %288
        %vm290 = vcmp.eq.s32.totalorder %v283, %v286
        %vm291 = vcmp.eq.s32.totalorder %v283, %v289
        %v292 = vsel %vm290, 1, 0
        %v293 = vsel %vm291, 1, 0
        %v294 = vcvt.s32.f32 %v292
        %v295 = vcvt.s32.f32 %v293
        %v296 = vpack.c.bf16 %v294, %v294
        %v297 = vpack.c.bf16 %v295, %v295
        %298 = vset.pattern.permute.xlu0 1
        %299 = vperm.xlu0 %298, %v276
        %v300 = vpop.permute.xlu0 %299
        %301 = vset.pattern.permute.xlu0 1
        %302 = vperm.xlu0 %301, %v277
        %v303 = vpop.permute.xlu0 %302
        %vm304 = vcmp.eq.s32.totalorder %v283, %v300
        %vm305 = vcmp.eq.s32.totalorder %v283, %v303
        %v306 = vsel %vm304, 1, 0
        %v307 = vsel %vm305, 1, 0
        %v308 = vcvt.s32.f32 %v306
        %v309 = vcvt.s32.f32 %v307
        %v310 = vpack.c.bf16 %v308, %v308
        %v311 = vpack.c.bf16 %v309, %v309
        %312 = vset.pattern.permute.xlu0 2
        %313 = vperm.xlu0 %312, %v276
        %v314 = vpop.permute.xlu0 %313
        %315 = vset.pattern.permute.xlu0 2
        %316 = vperm.xlu0 %315, %v277
        %v317 = vpop.permute.xlu0 %316
        %vm318 = vcmp.eq.s32.totalorder %v283, %v314
        %vm319 = vcmp.eq.s32.totalorder %v283, %v317
        %v320 = vsel %vm318, 1, 0
        %v321 = vsel %vm319, 1, 0
        %v322 = vcvt.s32.f32 %v320
        %v323 = vcvt.s32.f32 %v321
        %v324 = vpack.c.bf16 %v322, %v322
        %v325 = vpack.c.bf16 %v323, %v323
        %v328 = vunpack.c.l.b16 %v280
        %v329 = vunpack.c.l.b16 %v281
        %v330 = vpack.c.b16 %v329, %v328
        %v333 = vunpack.c.l.b16 %v296
        %v334 = vunpack.c.l.b16 %v297
        %v335 = vpack.c.b16 %v334, %v333
        %336 = vrot.lane.b32.xlu0 %v335, 6
        %v337 = vpop.permute.xlu0 %336
        %v340 = vunpack.c.l.b16 %v310
        %v341 = vunpack.c.l.b16 %v311
        %v342 = vpack.c.b16 %v341, %v340
        %343 = vrot.lane.b32.xlu0 %v342, 11
        %v344 = vpop.permute.xlu0 %343
        %v347 = vunpack.c.l.b16 %v324
        %v348 = vunpack.c.l.b16 %v325
        %v349 = vpack.c.b16 %v348, %v347
        %350 = vrot.lane.b32.xlu0 %v349, 18
        %v351 = vpop.permute.xlu0 %350
        %vm352 = vcmask 48128
        %v355 = vsel %vm352, %v330, %v337
        %vm356 = vcmask 89088
        %v358 = vsel %vm356, %v355, %v344
        %vm359 = vcmask 146432
        %v361 = vsel %vm359, %v358, %v351
        %v362 = vld [vmem:[%s2] sm:$0xff]
        %v363 = vld [vmem:[%s2 + $0x8] sm:$0xff]
        %v364 = vld [vmem:[%s2 + $0x10] sm:$0x77]
        %v365 = vld [vmem:[%s3] sm:$0x3]
        %v367 = vperm.slane %v365, 0
        %v368 = vperm.slane %v365, 1
        %v374 = vunpack.c.l.b16 %v362
        %v375 = vunpack.c.h.b16 %v362
        %v376 = vunpack.c.l.b16 %v363
        %v377 = vunpack.c.h.b16 %v363
        %v378 = vunpack.c.l.b16 %v364
        %v379 = vunpack.c.h.b16 %v364
        %v380 = vpack.c.b16 %v376, %v374
        %v381 = vpack.c.b16 %v377, %v375
        %v382 = vpack.c.b16 %v378, %v378
        %v383 = vpack.c.b16 %v379, %v379
        %vm386 = vcmask 179200
        %v387 = vsel %vm386, %v361, 0
        %vm389 = vcmask 1042432
        %v391 = vsel %vm389, %v382, 0
        %v394 = vsel %vm389, %v383, 0
        %396 = vmatpush.bf16.msra.mxu0 0
        %397 = vmatpush.bf16.msra.mxu0 0
        %398 = vmatpush.bf16.msra.mxu0 0
        %399 = vmatpush.bf16.msra.mxu0 0
        %400 = vmatpush.bf16.msra.mxu0 0
        %401 = vmatpush.bf16.msra.mxu0 0
        %402 = vmatpush.bf16.msra.mxu0 %v391
        %403 = vmatpush.bf16.msra.mxu0 %v380
        %404 = vmatmul.bf16.gmra.mxu0 %v387
        %v405 = vpop.f32.mrf.mxu0
        %v406 = vadd.f32 %v367, %v405
        %v407 = vpop.f32.mrf.mxu0
        %v408 = vadd.f32 %v367, %v407
        %409 = vdwg.mxu0
        %410 = vmatpush.bf16.msra.mxu0 0
        %411 = vmatpush.bf16.msra.mxu0 0
        %412 = vmatpush.bf16.msra.mxu0 0
        %413 = vmatpush.bf16.msra.mxu0 0
        %414 = vmatpush.bf16.msra.mxu0 0
        %415 = vmatpush.bf16.msra.mxu0 0
        %416 = vmatpush.bf16.msra.mxu0 %v394
        %417 = vmatpush.bf16.msra.mxu0 %v381
        %418 = vmatmul.bf16.gmra.mxu0 %v387
        %v419 = vpop.f32.mrf.mxu0
        %v420 = vadd.f32 %v368, %v419
        %v421 = vpop.f32.mrf.mxu0
        %v422 = vadd.f32 %v368, %v421
        %423 = vdwg.mxu0
        %v424 = vmax.f32 %v406, 0.0
        %v425 = vmax.f32 %v420, 0.0
        %v426 = vmax.f32 %v408, 0.0
        %v427 = vmax.f32 %v422, 0.0
        %v428 = vpack.c.bf16 %v426, %v424
        %v429 = vpack.c.bf16 %v427, %v425
        %v430 = vld [vmem:[%s4] sm:$0xf]
        %v431 = vld [vmem:[%s4 + $0x4] sm:$0xf]
        %v432 = vld [vmem:[%s4 + $0x8] sm:$0xf]
        %v433 = vld [vmem:[%s4 + $0xc] sm:$0xf]
        %v434 = vld [vmem:[%s4 + $0x10] sm:$0xf]
        %v435 = vld [vmem:[%s4 + $0x14] sm:$0xf]
        %v436 = vld [vmem:[%s4 + $0x18] sm:$0xf]
        %v437 = vld [vmem:[%s4 + $0x1c] sm:$0xf]
        %v438 = vld [vmem:[%s4 + $0x20] sm:$0xf]
        %v439 = vld [vmem:[%s4 + $0x24] sm:$0xf]
        %v440 = vld [vmem:[%s4 + $0x28] sm:$0xf]
        %v441 = vld [vmem:[%s4 + $0x2c] sm:$0xf]
        %v442 = vld [vmem:[%s4 + $0x30] sm:$0xf]
        %v443 = vld [vmem:[%s4 + $0x34] sm:$0xf]
        %v444 = vld [vmem:[%s4 + $0x38] sm:$0xf]
        %v445 = vld [vmem:[%s4 + $0x3c] sm:$0xf]
        %v446 = vld [vmem:[%s4 + $0x40] sm:$0xf]
        %v447 = vld [vmem:[%s4 + $0x44] sm:$0xf]
        %v448 = vld [vmem:[%s4 + $0x48] sm:$0x7]
        %v449 = vld [vmem:[%s5] sm:$0x1]
        %v451 = vperm.slane %v449, 0
        %v472 = vunpack.c.l.b16 %v430
        %v473 = vunpack.c.l.b16 %v431
        %v474 = vunpack.c.l.b16 %v432
        %v475 = vunpack.c.l.b16 %v433
        %v476 = vunpack.c.l.b16 %v434
        %v477 = vunpack.c.l.b16 %v435
        %v478 = vunpack.c.l.b16 %v436
        %v479 = vunpack.c.l.b16 %v437
        %v480 = vunpack.c.l.b16 %v438
        %v481 = vunpack.c.l.b16 %v439
        %v482 = vunpack.c.l.b16 %v440
        %v483 = vunpack.c.l.b16 %v441
        %v484 = vunpack.c.l.b16 %v442
        %v485 = vunpack.c.l.b16 %v443
        %v486 = vunpack.c.l.b16 %v444
        %v487 = vunpack.c.l.b16 %v445
        %v488 = vunpack.c.l.b16 %v446
        %v489 = vunpack.c.l.b16 %v447
        %v490 = vunpack.c.l.b16 %v448
        %v491 = vpack.c.b16 %v473, %v472
        %v492 = vpack.c.b16 %v475, %v474
        %v493 = vpack.c.b16 %v477, %v476
        %v494 = vpack.c.b16 %v479, %v478
        %v495 = vpack.c.b16 %v481, %v480
        %v496 = vpack.c.b16 %v483, %v482
        %v497 = vpack.c.b16 %v485, %v484
        %v498 = vpack.c.b16 %v487, %v486
        %v499 = vpack.c.b16 %v489, %v488
        %v500 = vpack.c.b16 %v490, %v490
        %v511 = vsel %vm386, %v429, 0
        %v514 = vsel %vm389, %v500, 0
        %516 = vmatpush.bf16.msra.mxu0 %v498
        %517 = vmatpush.bf16.msra.mxu0 %v497
        %518 = vmatpush.bf16.msra.mxu0 %v496
        %519 = vmatpush.bf16.msra.mxu0 %v495
        %520 = vmatpush.bf16.msra.mxu0 %v494
        %521 = vmatpush.bf16.msra.mxu0 %v493
        %522 = vmatpush.bf16.msra.mxu0 %v492
        %523 = vmatpush.bf16.msra.mxu0 %v491
        %524 = vmatmul.bf16.gmra.mxu0 %v428
        %v525 = vpop.f32.mrf.mxu0
        %v526 = vadd.f32 %v451, %v525
        %v527 = vpop.f32.mrf.mxu0
        %v528 = vadd.f32 %v451, %v527
        %529 = vdwg.mxu0
        %530 = vmatpush.bf16.msra.mxu0 0
        %531 = vmatpush.bf16.msra.mxu0 0
        %532 = vmatpush.bf16.msra.mxu0 0
        %533 = vmatpush.bf16.msra.mxu0 0
        %534 = vmatpush.bf16.msra.mxu0 0
        %535 = vmatpush.bf16.msra.mxu0 0
        %536 = vmatpush.bf16.msra.mxu0 %v514
        %537 = vmatpush.bf16.msra.mxu0 %v499
        %538 = vmatmul.bf16.gmra.mxu0 %v511
        %v539 = vpop.f32.mrf.mxu0
        %v540 = vadd.f32 %v526, %v539
        %v541 = vpop.f32.mrf.mxu0
        %v542 = vadd.f32 %v528, %v541
        %543 = vdwg.mxu0
        %v544 = vmax.f32 %v540, 0.0
        %v545 = vmax.f32 %v542, 0.0
        %vm546 = vcmask 408576
        %547 = vst.msk [vmem:[%s261] sm:$0xff] %vm546, %v544
        %548 = vst.msk [vmem:[%s261 + $0x8] sm:$0xff] %vm546, %v545
        %s549 = sand.u32 %s164, 1
        %s550 = scalar_lea.sflag [#allocation3], %s549
        %s551 = sand.u32 %s164, 1
        %s552 = smul.addr %s551, 16
        %s553 = scalar_lea.vmem [#allocation2], %s552
        // Predicated region
        $region45: #{tpu_custom_call.1} parent=43 // pred_check
          %p554 = pneg %p174
        $region46: #{tpu_custom_call.1} parent=43 // pred_check_branch
          %556 = sbr.rel (%p554) target = $region48
        $region47: #{tpu_custom_call.1} parent=43 // pred_region
          %s557 = smul.u32 2, %s20
          %559 = vsyncadd %s550, 0
          %s560 = smul.addr %s557, 8
          %s561 = scalar_lea.hbm %s6, %s560
          %s562 = sshll.u32 %s553, 4
          %s563 = int_to_ptr.vmem [resolvable:$true] %s562
          %s564 = sshll.u32 %s561, 4
          %s565 = int_to_ptr.hbm [resolvable:$true] %s564
          %570 = dma.vmem_to_hbm [thread:$0]  %s563, 256, %s565, %s550, 128, 128, 8
        $region48: #{tpu_custom_call.1} parent=43 // pred_fallthru
          _
      $region44: #{tpu_custom_call.1} parent=5 // pred_fallthru
        _
      %p571 = scmp.le.s32.totalorder 2, %s15
      // Predicated region
      $region49: #{tpu_custom_call.1} parent=5 // pred_check
        %p572 = pneg %p571
      $region50: #{tpu_custom_call.1} parent=5 // pred_check_branch
        %574 = sbr.rel (%p572) target = $region52
      $region51: #{tpu_custom_call.1} parent=5 // pred_region
        %s575 = ssub.s32 %s15, 2
        // Predicated region
        $region53: #{tpu_custom_call.1} parent=51 // pred_check
          %p576 = pneg %p180
        $region54: #{tpu_custom_call.1} parent=51 // pred_check_branch
          %578 = sbr.rel (%p576) target = $region56
        $region55: #{tpu_custom_call.1} parent=51 // pred_region
          %s579 = sand.u32 %s165, 1
          %s580 = scalar_lea.sflag [#allocation3], %s579
          %s581 = sand.u32 %s165, 1
          %s582 = smul.addr %s581, 16
          %s583 = scalar_lea.vmem [#allocation2], %s582
          %585 = dma.done %s580, 256
        $region56: #{tpu_custom_call.1} parent=51 // pred_fallthru
          _
      $region52: #{tpu_custom_call.1} parent=5 // pred_fallthru
        _
    $region6: #{tpu_custom_call.1} parent=1 // loop_footer
      %s19 = sadd.s32 1, %s15
    $region7: #{tpu_custom_call.1} parent=1 // loop_footer_branch
      %14 = sbr.rel target = $region3
    $region8: #{tpu_custom_call.1} parent=1 // loop_exit
      _
    %586 = vsyncpa [#allocation3], 1
    %s587 = scalar_lea.sflag [#allocation3], 1
    %588 = vsyncpa %s587, 1

</llo_original>
